<compile_context>
chip_gen: v7x
topology: tpu7x:2x2x1
jax: 0.10.0
libtpu: 0.0.40
codegen_flags: <defaults>
</compile_context>

<pallas_src>
import functools

import numpy as np
import jax
import jax.numpy as jnp
from jax import lax
from jax.experimental import pallas as pl
from jax.experimental.pallas import tpu as pltpu


# ----------------------------------------------------------------------------
# Pallas kernel: in-kernel channel-expansion of g (MXU, exact 0/1), bilinear
# combine (VPU), and corner-sum + deform-conv folded into one bf16 matmul.
# ----------------------------------------------------------------------------
def _deform_combine_matmul_kernel(g_ref, x_ref, e_ref, w_ref, o_ref):
    """One (tm, .) row tile.

    g_ref : (tm, 4N)          bf16  bilinear corner weights (corner-major cols)
    x_ref : (tm, 4N*C)        bf16  gathered corner samples (corner, pos, ch)
    e_ref : (4N, 4N*C)        bf16  0/1 block-diagonal expansion matrix
    w_ref : (4N*C, outc_pad)  bf16  conv weight tiled 4x along contraction dim
    o_ref : (tm, outc_pad)    bf16
    """
    f32 = jnp.float32
    # Channel-expand g on the MXU (exact: 0/1 matrix -> one term per sum).
    g_exp = jnp.dot(g_ref[...], e_ref[...], preferred_element_type=f32)
    # Bilinear weighting; multiply in f32 (portable across v5e/v6e/v7x VALUs).
    prod = g_exp * x_ref[...].astype(f32)
    # Corner sum + ks-strided conv in one bf16 MXU matmul, f32 accumulation.
    o_ref[...] = jnp.dot(prod.astype(jnp.bfloat16), w_ref[...],
                         preferred_element_type=f32).astype(o_ref.dtype)


def _round_up(a, b):
    return ((a + b - 1) // b) * b


def _pick_tile_m(M, g_cols, x_cols, o_cols, vmem_cap_bytes):
    """Pick the M tile.  VMEM accounting uses (sublane, lane)-padded block
    sizes (lane dim padded to 128) and includes double-buffering; targets
    >= 4 grid steps (>= 2 per TensorCore on v7x) before shrinking for VMEM."""
    itemsize = 2  # every streamed operand is bf16
    lane = lambda n: _round_up(n, 128)

    def vmem_need(tm):
        streamed = tm * (lane(g_cols) + lane(x_cols) + lane(o_cols)) * itemsize
        const = (_round_up(g_cols, 16) * lane(x_cols)
                 + _round_up(x_cols, 16) * lane(o_cols)) * itemsize
        return 2 * (streamed + const)          # double-buffered blocks

    # ~75% of physical VMEM: v7x 64 MiB -> 48 MiB; v5e/v6e 128 MiB -> 96 MiB.
    budget = int(0.75 * vmem_cap_bytes)
    tm_max = 1024 if vmem_cap_bytes >= 100 * 1024 * 1024 else 512

    tm = tm_max
    while tm > 128 and pl.cdiv(M, tm) < 4:
        tm //= 2
    while tm > 128 and vmem_need(tm) > budget:
        tm //= 2
    vmem_limit = int(min(budget,
                         max(32 * 1024 * 1024, int(1.25 * vmem_need(tm)))))
    return tm, vmem_limit


def deform_combine_matmul(g_cat, x_cat, e_cat, w4, *, tm, vmem_limit_bytes):
    """g_cat:(Mp,4N) bf16; x_cat:(Mp,4NC) bf16; e_cat:(4N,4NC) bf16;
    w4:(4NC,outc_pad) bf16 -> (Mp, outc_pad) bf16."""
    Mp, g_cols = g_cat.shape
    x_cols = x_cat.shape[1]
    o_cols = w4.shape[1]
    assert Mp % tm == 0
    grid = (Mp // tm,)

    flops = 2 * Mp * g_cols * x_cols + 2 * Mp * x_cols * o_cols + Mp * x_cols
    bytes_accessed = 2 * (Mp * g_cols + Mp * x_cols + g_cols * x_cols
                          + x_cols * o_cols + Mp * o_cols)

    return pl.pallas_call(
        _deform_combine_matmul_kernel,
        out_shape=jax.ShapeDtypeStruct((Mp, o_cols), jnp.bfloat16),
        grid=grid,
        in_specs=[
            pl.BlockSpec((tm, g_cols), lambda i: (i, 0)),
            pl.BlockSpec((tm, x_cols), lambda i: (i, 0)),
            # Grid-invariant blocks (DMA re-issue skipped after step 0).
            # TODO(synk): pipeline_mode=pl.Buffered(1) would drop one redundant
            # VMEM copy of E/W4; only matters at much larger K*outc.
            pl.BlockSpec((g_cols, x_cols), lambda i: (0, 0)),
            pl.BlockSpec((x_cols, o_cols), lambda i: (0, 0)),
        ],
        out_specs=pl.BlockSpec((tm, o_cols), lambda i: (i, 0)),
        compiler_params=pltpu.CompilerParams(
            dimension_semantics=("parallel",),
            vmem_limit_bytes=int(vmem_limit_bytes)),
        cost_estimate=pl.CostEstimate(flops=flops, transcendentals=0,
                                      bytes_accessed=bytes_accessed),
    )(g_cat, x_cat, e_cat, w4)


# ----------------------------------------------------------------------------
# Plain-JAX glue shared by the Pallas path and the f32 reference:
# p_conv offset conv, sampling coordinates, corner indices, bilinear weights.
# ----------------------------------------------------------------------------
def _deform_prep(x, params, *, kernel_size, padding, stride, modulation):
    B, C, H, W = x.shape
    ks = kernel_size
    N = ks * ks
    f32 = jnp.float32

    # offset = p_conv(x): Conv2d(C, 2N, k=3, pad=1, stride=stride)
    offset = lax.conv_general_dilated(
        x, params["p_conv_w"], window_strides=(stride, stride),
        padding=((1, 1), (1, 1)),
        dimension_numbers=("NCHW", "OIHW", "NCHW"))
    offset = offset + params["p_conv_b"][None, :, None, None]
    h, w = offset.shape[2], offset.shape[3]

    m = None
    if modulation:
        m = lax.conv_general_dilated(
            x, params["m_conv_w"], window_strides=(stride, stride),
            padding=((1, 1), (1, 1)),
            dimension_numbers=("NCHW", "OIHW", "NCHW"))
        m = jax.nn.sigmoid(m + params["m_conv_b"][None, :, None, None])
        m = jnp.transpose(m, (0, 2, 3, 1))                           # (B,h,w,N)

    # zero-pad input (nn.ZeroPad2d(padding))
    x_pad = jnp.pad(x, ((0, 0), (0, 0), (padding, padding), (padding, padding)))
    Hp, Wp = x_pad.shape[2], x_pad.shape[3]

    # p = p_0 + p_n + offset  (matches _get_p / _get_p_n / _get_p_0)
    ax = jnp.arange(-(ks - 1) // 2, (ks - 1) // 2 + 1, dtype=f32)
    pnx, pny = jnp.meshgrid(ax, ax, indexing="ij")
    p_n = jnp.concatenate([pnx.ravel(), pny.ravel()])                # (2N,)
    ih = jnp.arange(1, h * stride + 1, stride, dtype=f32)
    iw = jnp.arange(1, w * stride + 1, stride, dtype=f32)
    p0x, p0y = jnp.meshgrid(ih, iw, indexing="ij")                   # (h, w)
    p0 = jnp.concatenate([jnp.broadcast_to(p0x, (N, h, w)),
                          jnp.broadcast_to(p0y, (N, h, w))], axis=0)  # (2N,h,w)
    p = p0[None] + p_n[None, :, None, None] + offset                 # (B,2N,h,w)
    p = jnp.transpose(p, (0, 2, 3, 1))                               # (B,h,w,2N)

    def clamp_xy(q):
        return jnp.concatenate([jnp.clip(q[..., :N], 0, Hp - 1),
                                jnp.clip(q[..., N:], 0, Wp - 1)], axis=-1)

    q_lt = clamp_xy(jnp.floor(p)).astype(jnp.int32)
    q_rb = clamp_xy(jnp.floor(p) + 1).astype(jnp.int32)
    q_lb = jnp.concatenate([q_lt[..., :N], q_rb[..., N:]], axis=-1)
    q_rt = jnp.concatenate([q_rb[..., :N], q_lt[..., N:]], axis=-1)
    p = clamp_xy(p)
    px, py = p[..., :N], p[..., N:]

    def bilinear_g(q, sx, sy):
        qx = q[..., :N].astype(f32)
        qy = q[..., N:].astype(f32)
        return (1 + sx * (qx - px)) * (1 + sy * (qy - py))

    g_lt = bilinear_g(q_lt, +1, +1)
    g_rb = bilinear_g(q_rb, -1, -1)
    g_lb = bilinear_g(q_lb, +1, -1)
    g_rt = bilinear_g(q_rt, -1, +1)

    if modulation:
        # x_offset *= m broadcasts over channels & corners == scale each g by m.
        g_lt, g_rb, g_lb, g_rt = (g_lt * m, g_rb * m, g_lb * m, g_rt * m)

    return (x_pad, (h, w), (Hp, Wp),
            (q_lt, q_rb, q_lb, q_rt), (g_lt, g_rb, g_lb, g_rt))


# ----------------------------------------------------------------------------
# DeformConv2d forward: JAX glue + Pallas hot path
# ----------------------------------------------------------------------------
def deform_conv2d_forward(x, params, *, kernel_size=3, padding=1, stride=1,
                          modulation=False):
    B, C, H, W = x.shape
    ks = kernel_size
    N = ks * ks
    outc = params["conv_w"].shape[0]

    (x_pad, (h, w), (Hp, Wp), q_corners, g_corners) = _deform_prep(
        x, params, kernel_size=kernel_size, padding=padding, stride=stride,
        modulation=modulation)

    M = B * h * w
    K = N * C                              # per-corner column count (n*C + ch)
    N4, K4 = 4 * N, 4 * K
    outc_pad = _round_up(outc, 128)        # lane-dense output stores

    try:
        vmem_cap = int(getattr(pltpu.get_tpu_info(), "vmem_capacity_bytes",
                               64 * 1024 * 1024))
    except Exception:
        vmem_cap = 64 * 1024 * 1024        # conservative (v7x) fallback
    tm, vmem_limit = _pick_tile_m(M, N4, K4, outc_pad, vmem_cap)
    Mp = _round_up(M, tm)
    pad_rows = Mp - M

    # NHWC gather source so the (row, corner, pos, channel) matrix falls
    # directly out of one gather + reshape (no big transpose of gathered data).
    x_src = jnp.transpose(x_pad, (0, 2, 3, 1)).reshape(B * Hp * Wp, C)
    batch_off = (jnp.arange(B, dtype=jnp.int32)
                 * (Hp * Wp))[:, None, None, None]

    def corner_index(q):                                   # (B,h,w,2N)->(M,N)
        return (q[..., :N] * Wp + q[..., N:] + batch_off).reshape(M, N)

    # Combined corner-major columns: col = c*N + n (corner order lt,rb,lb,rt).
    idx = jnp.stack([corner_index(q) for q in q_corners], axis=1).reshape(M, N4)
    g_cat = jnp.stack([g.reshape(M, N).astype(jnp.float32)
                       for g in g_corners], axis=1).reshape(M, N4)
    if pad_rows:
        # Padded rows gather row 0 with zero g weights; the results land in the
        # pad rows of the output and are discarded by the final [:M] slice.
        idx = jnp.pad(idx, ((0, pad_rows), (0, 0)))
        g_cat = jnp.pad(g_cat, ((0, pad_rows), (0, 0)))
    g_cat = g_cat.astype(jnp.bfloat16)

    # One gather for all 4 corners: (Mp, 4N*C) bf16, col = c*K + n*C + ch.
    # TODO(synk): pull this data-dependent gather into the kernel (pl.ANY x_pad
    # + scalar-prefetched indices / in-VMEM take) to avoid the extra HBM
    # round-trip of the gathered matrix; kept in XLA for compile robustness.
    x_cat = jnp.take(x_src, idx.reshape(Mp * N4), axis=0, mode="clip")
    x_cat = x_cat.astype(jnp.bfloat16).reshape(Mp, N4 * C)

    # Block-diagonal 0/1 expansion matrix E[c*N+n, c*K + n*C + ch] = 1
    # (host constant; exact in bf16).
    e_np = np.zeros((N4, K4), np.float32)
    for c4 in range(4):
        for n in range(N):
            e_np[c4 * N + n, c4 * K + n * C:c4 * K + (n + 1) * C] = 1.0
    e_cat = jnp.asarray(e_np, dtype=jnp.bfloat16)

    # conv weight (outc, C, ks, ks) -> (K, outc) with rows ordered (n, c);
    # tile 4x vertically so the corner sum folds into the conv matmul; pad
    # columns to a multiple of 128 for lane-dense unmasked output stores.
    w_flat = jnp.transpose(params["conv_w"], (2, 3, 1, 0)).reshape(K, outc)
    w4 = jnp.tile(w_flat, (4, 1))
    w4 = jnp.pad(w4, ((0, 0), (0, outc_pad - outc))).astype(jnp.bfloat16)

    out_mat = deform_combine_matmul(g_cat, x_cat, e_cat, w4, tm=tm,
                                    vmem_limit_bytes=vmem_limit)
    out = out_mat[:M, :outc].astype(jnp.float32)
    return out.reshape(B, h, w, outc).transpose(0, 3, 1, 2)          # NCHW f32


# ----------------------------------------------------------------------------
# Pure-JAX f32 reference (mirrors the PyTorch module forward exactly)
# ----------------------------------------------------------------------------
def deform_conv2d_reference(x, params, *, kernel_size=3, padding=1, stride=1,
                            modulation=False):
    B, C, H, W = x.shape
    ks = kernel_size
    N = ks * ks
    outc = params["conv_w"].shape[0]

    (x_pad, (h, w), (Hp, Wp), q_corners, g_corners) = _deform_prep(
        x, params, kernel_size=kernel_size, padding=padding, stride=stride,
        modulation=modulation)

    x_flat = x_pad.reshape(B, C, Hp * Wp)

    def gather(q):
        idx = (q[..., :N] * Wp + q[..., N:]).reshape(B, 1, h * w * N)
        idx = jnp.broadcast_to(idx, (B, C, h * w * N))
        return jnp.take_along_axis(x_flat, idx, axis=2).reshape(B, C, h, w, N)

    x_off = sum(g[:, None] * gather(q) for g, q in zip(g_corners, q_corners))
    w_r = params["conv_w"].reshape(outc, C, N)        # (o, c, n), n = ki*ks+kj
    out = jnp.einsum("bchwn,ocn->bohw", x_off, w_r)
    return out


# ----------------------------------------------------------------------------
# Deterministic parameter init (shapes per DeformConv2d.__init__)
# ----------------------------------------------------------------------------
def init_params(key, inc, outc, ks=3, modulation=False):
    N = ks * ks
    k1, k2, k3, _ = jax.random.split(key, 4)
    params = {
        # p_conv: weight zero-initialized (as in the module), bias present.
        "p_conv_w": jnp.zeros((2 * N, inc, 3, 3), jnp.float32),
        "p_conv_b": jax.random.uniform(k1, (2 * N,), jnp.float32, -1.5, 1.5),
        # final conv: Conv2d(inc, outc, k=ks, stride=ks, bias=None) -> no bias.
        "conv_w": 0.1 * jax.random.normal(k2, (outc, inc, ks, ks), jnp.float32),
    }
    if modulation:
        params["m_conv_w"] = jnp.zeros((N, inc, 3, 3), jnp.float32)
        params["m_conv_b"] = jax.random.uniform(k3, (N,), jnp.float32, -1.0, 1.0)
    return params


if __name__ == "__main__":
    key = jax.random.PRNGKey(0)
    kx, kp = jax.random.split(key)

    B, C_in, H, W = 2, 4, 16, 16
    C_out, ks = 8, 3

    x = jax.random.normal(kx, (B, C_in, H, W), jnp.float32)
    params = init_params(kp, C_in, C_out, ks, modulation=False)

    fwd = jax.jit(functools.partial(deform_conv2d_forward, kernel_size=ks,
                                    padding=1, stride=1, modulation=False))
    out = jax.block_until_ready(fwd(x, params))
    assert out.shape == (B, C_out, H, W), out.shape

    out_ref = jax.block_until_ready(
        deform_conv2d_reference(x, params, kernel_size=ks, padding=1,
                                stride=1, modulation=False))
    # bf16-streamed samples/weights + bf16 output vs f32 reference:
    # ~0.5-1% relative error expected; 3e-2 still catches structural bugs.
    np.testing.assert_allclose(np.asarray(out), np.asarray(out_ref),
                               rtol=3e-2, atol=3e-2)

    print("KERNEL_OK")
</pallas_src>

<mosaic_0001>
module attributes {stable_mosaic.version = 11 : i64} {
  func.func @_deform_combine_matmul_kernel(%arg0: i32, %arg1: memref<128x36xbf16, #tpu.memory_space<vmem>>, %arg2: memref<128x144xbf16, #tpu.memory_space<vmem>>, %arg3: memref<36x144xbf16, #tpu.memory_space<vmem>>, %arg4: memref<144x128xbf16, #tpu.memory_space<vmem>>, %arg5: memref<128x128xbf16, #tpu.memory_space<vmem>>) attributes {dimension_semantics = [#tpu.dimension_semantics<parallel>], iteration_bounds = array<i64: 4>, scalar_prefetch = 0 : i64, scratch_operands = 0 : i64, tpu.core_type = #tpu.core_type<tc>, window_params = [{transform_indices = @transform_0, window_bounds = array<i64: 128, 36>}, {transform_indices = @transform_1, window_bounds = array<i64: 128, 144>}, {pipeline_mode = #tpu.pipeline_mode<synchronous>, transform_indices = @transform_2, window_bounds = array<i64: 36, 144>}, {pipeline_mode = #tpu.pipeline_mode<synchronous>, transform_indices = @transform_3, window_bounds = array<i64: 144, 128>}, {transform_indices = @transform_4, window_bounds = array<i64: 128, 128>}]} {
    %c0 = arith.constant 0 : index
    %c0_0 = arith.constant 0 : index
    %0 = vector.load %arg1[%c0, %c0_0] : memref<128x36xbf16, #tpu.memory_space<vmem>>, vector<128x36xbf16>
    %c0_1 = arith.constant 0 : index
    %c0_2 = arith.constant 0 : index
    %1 = vector.load %arg3[%c0_1, %c0_2] : memref<36x144xbf16, #tpu.memory_space<vmem>>, vector<36x144xbf16>
    %cst = arith.constant dense<0.000000e+00> : vector<128x144xf32>
    %2 = tpu.matmul %0, %1, %cst {dimension_numbers = #tpu.dot_dimension_numbers<[1], [0], [0], [1], [0, 0, 1, 1], [], []>} : vector<128x36xbf16>, vector<36x144xbf16>, vector<128x144xf32> -> vector<128x144xf32>
    %c0_3 = arith.constant 0 : index
    %c0_4 = arith.constant 0 : index
    %3 = vector.load %arg2[%c0_3, %c0_4] : memref<128x144xbf16, #tpu.memory_space<vmem>>, vector<128x144xbf16>
    %4 = arith.extf %3 : vector<128x144xbf16> to vector<128x144xf32>
    %5 = arith.mulf %2, %4 : vector<128x144xf32>
    %6 = arith.truncf %5 : vector<128x144xf32> to vector<128x144xbf16>
    %c0_5 = arith.constant 0 : index
    %c0_6 = arith.constant 0 : index
    %7 = vector.load %arg4[%c0_5, %c0_6] : memref<144x128xbf16, #tpu.memory_space<vmem>>, vector<144x128xbf16>
    %cst_7 = arith.constant dense<0.000000e+00> : vector<128x128xf32>
    %8 = tpu.matmul %6, %7, %cst_7 {dimension_numbers = #tpu.dot_dimension_numbers<[1], [0], [0], [1], [0, 0, 1, 1], [], []>} : vector<128x144xbf16>, vector<144x128xbf16>, vector<128x128xf32> -> vector<128x128xf32>
    %9 = arith.truncf %8 : vector<128x128xf32> to vector<128x128xbf16>
    %c0_8 = arith.constant 0 : index
    %c0_9 = arith.constant 0 : index
    %10 = vector.load %arg5[%c0_8, %c0_9] : memref<128x128xbf16, #tpu.memory_space<vmem>>, vector<128x128xbf16>
    tpu.vector_store %arg5[%c0_8, %c0_9], %9 {strides = array<i32>} : memref<128x128xbf16, #tpu.memory_space<vmem>>, vector<128x128xbf16>,
    return
  }
  func.func @transform_0(%arg0: i32) -> (i32, i32) {
    %c0_i32 = arith.constant 0 : i32
    %c0_i32_0 = arith.constant 0 : i32
    return %arg0, %c0_i32 : i32, i32
  }
  func.func @transform_1(%arg0: i32) -> (i32, i32) {
    %c0_i32 = arith.constant 0 : i32
    %c0_i32_0 = arith.constant 0 : i32
    return %arg0, %c0_i32 : i32, i32
  }
  func.func @transform_2(%arg0: i32) -> (i32, i32) {
    %c0_i32 = arith.constant 0 : i32
    %c0_i32_0 = arith.constant 0 : i32
    %c0_i32_1 = arith.constant 0 : i32
    return %c0_i32, %c0_i32_0 : i32, i32
  }
  func.func @transform_3(%arg0: i32) -> (i32, i32) {
    %c0_i32 = arith.constant 0 : i32
    %c0_i32_0 = arith.constant 0 : i32
    %c0_i32_1 = arith.constant 0 : i32
    return %c0_i32, %c0_i32_0 : i32, i32
  }
  func.func @transform_4(%arg0: i32) -> (i32, i32) {
    %c0_i32 = arith.constant 0 : i32
    %c0_i32_0 = arith.constant 0 : i32
    return %arg0, %c0_i32 : i32, i32
  }
}

</mosaic_0001>

<llo_original>
// kernel: tile.0
$region0: #{tile.0}
  %s0 = inlined_call_operand.vmem [shape: bf16[4,36,8], index: 0, kind: input, shape index: {}]
  %s1 = inlined_call_operand.vmem [shape: bf16[144,8], index: 1, kind: output, shape index: {}]
  $region1: #{tile.0} parent=0
    #allocation0 [shape = 'u8[8192]{0}', space=vmem, size = 0x2000, scoped, tag = 'scoped mem for output reshape']
    #allocation1 [shape = 'u8[32768]{0}', space=vmem, size = 0x8000, scoped, tag = 'scoped mem for input reshape']
    %s3 = smul.u32 2, 2
    %s4 = sshllo.u32 0, %s3
    %s5 = smul.addr 2, 7
    %s6 = scalar_lea.vmem %s0, %s5
    %s7 = sshrl.u32 %s4, 1
    %s8 = sor.u32 %s4, %s7
    %s9 = sand.u32 %s8, 85
    %s10 = sshrl.u32 %s9, 1
    %s11 = sor.u32 %s9, %s10
    %s12 = sand.u32 51, %s11
    %s13 = sshrl.u32 %s12, 2
    %s14 = sor.u32 %s12, %s13
    %s15 = sand.u32 15, %s14
    %v16 = vld [vmem:[%s6] sm:%s15]
    %v17 = vunpack.c.l.bf16 %v16
    %v18 = vunpack.c.h.bf16 %v16
    %s19 = scalar_lea.vmem [#allocation1], 56
    %20 = vst [vmem:[%s19] sm:%s4] %v17
    %s21 = smul.addr 2, 6
    %s22 = scalar_lea.vmem %s0, %s21
    %s23 = sshrl.u32 %s4, 1
    %s24 = sor.u32 %s4, %s23
    %s25 = sand.u32 %s24, 85
    %s26 = sshrl.u32 %s25, 1
    %s27 = sor.u32 %s25, %s26
    %s28 = sand.u32 51, %s27
    %s29 = sshrl.u32 %s28, 2
    %s30 = sor.u32 %s28, %s29
    %s31 = sand.u32 15, %s30
    %v32 = vld [vmem:[%s22] sm:%s31]
    %v33 = vunpack.c.l.bf16 %v32
    %v34 = vunpack.c.h.bf16 %v32
    %s35 = scalar_lea.vmem [#allocation1], 48
    %36 = vst [vmem:[%s35] sm:%s4] %v33
    %s37 = smul.addr 2, 5
    %s38 = scalar_lea.vmem %s0, %s37
    %s39 = sshrl.u32 %s4, 1
    %s40 = sor.u32 %s4, %s39
    %s41 = sand.u32 %s40, 85
    %s42 = sshrl.u32 %s41, 1
    %s43 = sor.u32 %s41, %s42
    %s44 = sand.u32 51, %s43
    %s45 = sshrl.u32 %s44, 2
    %s46 = sor.u32 %s44, %s45
    %s47 = sand.u32 15, %s46
    %v48 = vld [vmem:[%s38] sm:%s47]
    %v49 = vunpack.c.l.bf16 %v48
    %v50 = vunpack.c.h.bf16 %v48
    %s51 = scalar_lea.vmem [#allocation1], 40
    %52 = vst [vmem:[%s51] sm:%s4] %v49
    %s53 = smul.addr 2, 4
    %s54 = scalar_lea.vmem %s0, %s53
    %s55 = sshrl.u32 %s4, 1
    %s56 = sor.u32 %s4, %s55
    %s57 = sand.u32 %s56, 85
    %s58 = sshrl.u32 %s57, 1
    %s59 = sor.u32 %s57, %s58
    %s60 = sand.u32 51, %s59
    %s61 = sshrl.u32 %s60, 2
    %s62 = sor.u32 %s60, %s61
    %s63 = sand.u32 15, %s62
    %v64 = vld [vmem:[%s54] sm:%s63]
    %v65 = vunpack.c.l.bf16 %v64
    %v66 = vunpack.c.h.bf16 %v64
    %s67 = scalar_lea.vmem [#allocation1], 32
    %68 = vst [vmem:[%s67] sm:%s4] %v65
    %s69 = smul.addr 2, 3
    %s70 = scalar_lea.vmem %s0, %s69
    %s71 = sshrl.u32 %s4, 1
    %s72 = sor.u32 %s4, %s71
    %s73 = sand.u32 %s72, 85
    %s74 = sshrl.u32 %s73, 1
    %s75 = sor.u32 %s73, %s74
    %s76 = sand.u32 51, %s75
    %s77 = sshrl.u32 %s76, 2
    %s78 = sor.u32 %s76, %s77
    %s79 = sand.u32 15, %s78
    %v80 = vld [vmem:[%s70] sm:%s79]
    %v81 = vunpack.c.l.bf16 %v80
    %v82 = vunpack.c.h.bf16 %v80
    %s83 = scalar_lea.vmem [#allocation1], 24
    %84 = vst [vmem:[%s83] sm:%s4] %v81
    %s85 = smul.addr 2, 2
    %s86 = scalar_lea.vmem %s0, %s85
    %s87 = sshrl.u32 %s4, 1
    %s88 = sor.u32 %s4, %s87
    %s89 = sand.u32 %s88, 85
    %s90 = sshrl.u32 %s89, 1
    %s91 = sor.u32 %s89, %s90
    %s92 = sand.u32 51, %s91
    %s93 = sshrl.u32 %s92, 2
    %s94 = sor.u32 %s92, %s93
    %s95 = sand.u32 15, %s94
    %v96 = vld [vmem:[%s86] sm:%s95]
    %v97 = vunpack.c.l.bf16 %v96
    %v98 = vunpack.c.h.bf16 %v96
    %s99 = scalar_lea.vmem [#allocation1], 16
    %100 = vst [vmem:[%s99] sm:%s4] %v97
    %s101 = scalar_lea.vmem %s0, 2
    %s102 = sshrl.u32 %s4, 1
    %s103 = sor.u32 %s4, %s102
    %s104 = sand.u32 %s103, 85
    %s105 = sshrl.u32 %s104, 1
    %s106 = sor.u32 %s104, %s105
    %s107 = sand.u32 51, %s106
    %s108 = sshrl.u32 %s107, 2
    %s109 = sor.u32 %s107, %s108
    %s110 = sand.u32 15, %s109
    %v111 = vld [vmem:[%s101] sm:%s110]
    %v112 = vunpack.c.l.bf16 %v111
    %v113 = vunpack.c.h.bf16 %v111
    %s114 = scalar_lea.vmem [#allocation1], 8
    %115 = vst [vmem:[%s114] sm:%s4] %v112
    %s116 = sshrl.u32 %s4, 1
    %s117 = sor.u32 %s4, %s116
    %s118 = sand.u32 %s117, 85
    %s119 = sshrl.u32 %s118, 1
    %s120 = sor.u32 %s118, %s119
    %s121 = sand.u32 51, %s120
    %s122 = sshrl.u32 %s121, 2
    %s123 = sor.u32 %s121, %s122
    %s124 = sand.u32 15, %s123
    %v125 = vld [vmem:[%s0] sm:%s124]
    %v126 = vunpack.c.l.bf16 %v125
    %v127 = vunpack.c.h.bf16 %v125
    %128 = vst [vmem:[#allocation1] sm:%s4] %v126
    %v129 = vld [vmem:[#allocation1] ss:$8 sm:$0xf]
    %v130 = vld [vmem:[#allocation1] ss:$8 sm:$0xf0]
    %vm131 = vcmask 1047556
    %v132 = vsel %vm131, %v130, %v129
    %vm133 = vcmask 293888
    %134 = vst.msk [vmem:[#allocation0] sm:$0xff] %vm133, %v132
    %s135 = scalar_lea.vmem [#allocation1], 3
    %v136 = vld [vmem:[%s135] ss:$8 sm:$0xf]
    %s137 = scalar_lea.vmem [#allocation1], 3
    %v138 = vld [vmem:[%s137] ss:$8 sm:$0xf0]
    %vm139 = vcmask 1047556
    %v140 = vsel %vm139, %v138, %v136
    %s141 = scalar_lea.vmem [#allocation1], 3
    %v142 = vld [vmem:[%s141] ss:$8 sm:$0xf]
    %s143 = scalar_lea.vmem [#allocation1], 3
    %v144 = vld [vmem:[%s143] ss:$8 sm:$0xf0]
    %vm145 = vcmask 1047556
    %v146 = vsel %vm145, %v144, %v142
    %vm147 = vcmask 162816
    %v148 = vsel %vm147, %v146, %v140
    %149 = vrot.lane.b32.xlu0 %v148, 108
    %v150 = vpop.permute.xlu0 %149
    %vm151 = vcmask 130048
    %s152 = scalar_lea.vmem [#allocation0], 8
    %153 = vst.msk [vmem:[%s152] sm:$0xff] %vm151, %v150
    %vm154 = vcmask 1048416
    %155 = vst.msk [vmem:[#allocation0] sm:$0xff] %vm154, %v150
    %s156 = scalar_lea.vmem [#allocation1], 2
    %v157 = vld [vmem:[%s156] ss:$8 sm:$0xf]
    %s158 = scalar_lea.vmem [#allocation1], 2
    %v159 = vld [vmem:[%s158] ss:$8 sm:$0xf0]
    %vm160 = vcmask 1047556
    %v161 = vsel %vm160, %v159, %v157
    %162 = vrot.lane.b32.xlu0 %v161, 72
    %v163 = vpop.permute.xlu0 %162
    %vm164 = vcmask 884288
    %165 = vst.msk [vmem:[#allocation0] sm:$0xff] %vm164, %v163
    %s166 = scalar_lea.vmem [#allocation1], 1
    %v167 = vld [vmem:[%s166] ss:$8 sm:$0xf]
    %s168 = scalar_lea.vmem [#allocation1], 1
    %v169 = vld [vmem:[%s168] ss:$8 sm:$0xf0]
    %vm170 = vcmask 1047556
    %v171 = vsel %vm170, %v169, %v167
    %172 = vrot.lane.b32.xlu0 %v171, 36
    %v173 = vpop.permute.xlu0 %172
    %vm174 = vcmask 589088
    %175 = vst.msk [vmem:[#allocation0] sm:$0xff] %vm174, %v173
    %s177 = smul.u32 4, 2
    %s178 = sshllo.u32 0, %s177
    %s179 = sshrl.u32 %s177, 1
    %v180 = vld [vmem:[#allocation0] sm:%s178]
    %v181 = vpack.c.bf16 0.0, %v180
    %s182 = sshllo.u32 0, %s179
    %183 = vst [vmem:[%s1] sm:%s182] %v181
    %s184 = scalar_lea.vmem [#allocation0], 8
    %v185 = vld [vmem:[%s184] sm:%s178]
    %v186 = vpack.c.bf16 0.0, %v185
    %s187 = sshllo.u32 0, %s179
    %s188 = scalar_lea.vmem %s1, 4
    %189 = vst [vmem:[%s188] sm:%s187] %v186

// kernel: deform_conv2d_forward.1
$region0: #{deform_conv2d_forward.1}
  #allocation0 [shape = 'u32[]', space=smem, size = 0x4, offset = 0x4, fixed_abs, tag = 'smem constant byte address 0x4 - core index']
  #allocation1 [shape = 'u32[144,128]{1,0:T(1,128)}', space=vmem, size = 0x12000, scoped, tag = 'internal scratch']
  %s0 = inlined_call_operand.vmem [shape: bf16[512,36], index: 0, kind: input, shape index: {}]
  %s1 = inlined_call_operand.vmem [shape: bf16[512,144], index: 1, kind: input, shape index: {}]
  %s2 = inlined_call_operand.vmem [shape: bf16[36,144], index: 2, kind: input, shape index: {}]
  %s3 = inlined_call_operand.vmem [shape: bf16[144,128], index: 3, kind: input, shape index: {}]
  %s4 = inlined_call_operand.vmem [shape: bf16[512,128], index: 4, kind: output, shape index: {}]
  %s5 = sld [smem:[#allocation0]]
  $region49: #{deform_conv2d_forward.1} parent=0
    _
  %s7 = ssub.s32 1, %s5
  %s8 = scalar_select 0, %s7, %s5
  loop: start=0, step=1, limit=6
  $region2: #{deform_conv2d_forward.1} parent=0 // loop_pre_header
    _
  $region3: #{deform_conv2d_forward.1} parent=0 // loop_header
    %s10 = sphi 0, %s14
    %p11 = scmp.ge.s32.totalorder %s10, 6
    %s20 = sphi 0, %s22
    %s23 = sphi 0, %s20
    %s24 = sphi 0, %s23
    %s40 = sphi 0, %s24
    %s46 = sphi 0, %s48
    %s49 = sphi 0, %s46
    %s50 = sphi 0, %s49
    %s66 = sphi 0, %s50
    %s70 = sphi 0, %s70
    %s72 = sphi 0, %s70
    %s73 = sphi 0, %s72
    %s87 = sphi 0, %s73
    %s91 = sphi 0, %s91
    %s93 = sphi 0, %s91
    %s94 = sphi 0, %s93
    %s108 = sphi 0, %s94
    %s114 = sphi 0, %s116
    %s117 = sphi 0, %s114
    %s118 = sphi 0, %s117
    %s134 = sphi 0, %s118
  $region4: #{deform_conv2d_forward.1} parent=0 // loop_header_branch
    %13 = sbr.rel (%p11) target = $region8
  $region5: #{deform_conv2d_forward.1} parent=0 // loop_body
    %s15 = ssub.s32 %s10, 1
    %s16 = ssub.s32 %s10, 2
    %s17 = sadd.s32 %s10, 1
    %s18 = ssub.s32 %s10, %s17
    %p19 = scmp.eq.s32.totalorder %s18, 0
    %s21 = sadd.s32 %s20, 1
    %s22 = scalar_select %p19, %s20, %s21
    %p25 = pneg %p19
    %p26 = scmp.eq.s32.totalorder %s10, 3
    %p27 = por %p25, %p26
    %p28 = scmp.ne.s32.totalorder %s20, %s23
    %p29 = scmp.eq.s32.totalorder %s10, 0
    %p30 = por %p28, %p29
    %p31 = scmp.ne.s32.totalorder %s20, %s23
    %p32 = scmp.eq.s32.totalorder %s15, 3
    %p33 = por %p31, %p32
    %p34 = scmp.ne.s32.totalorder %s23, %s24
    %p35 = scmp.eq.s32.totalorder %s15, 0
    %p36 = por %p34, %p35
    %p37 = scmp.ne.s32.totalorder %s23, %s24
    %p38 = scmp.eq.s32.totalorder %s16, 3
    %p39 = por %p37, %p38
    %p41 = scmp.ne.s32.totalorder %s24, %s40
    %p42 = scmp.eq.s32.totalorder %s16, 0
    %p43 = por %p41, %p42
    %s44 = ssub.s32 %s10, %s17
    %p45 = scmp.eq.s32.totalorder %s44, 0
    %s47 = sadd.s32 %s46, 1
    %s48 = scalar_select %p45, %s46, %s47
    %p51 = pneg %p45
    %p52 = scmp.eq.s32.totalorder %s10, 3
    %p53 = por %p51, %p52
    %p54 = scmp.ne.s32.totalorder %s46, %s49
    %p55 = scmp.eq.s32.totalorder %s10, 0
    %p56 = por %p54, %p55
    %p57 = scmp.ne.s32.totalorder %s46, %s49
    %p58 = scmp.eq.s32.totalorder %s15, 3
    %p59 = por %p57, %p58
    %p60 = scmp.ne.s32.totalorder %s49, %s50
    %p61 = scmp.eq.s32.totalorder %s15, 0
    %p62 = por %p60, %p61
    %p63 = scmp.ne.s32.totalorder %s49, %s50
    %p64 = scmp.eq.s32.totalorder %s16, 3
    %p65 = por %p63, %p64
    %p67 = scmp.ne.s32.totalorder %s50, %s66
    %p68 = scmp.eq.s32.totalorder %s16, 0
    %p69 = por %p67, %p68
    %s71 = sadd.s32 %s70, 1
    %p74 = scmp.eq.s32.totalorder %s10, 3
    %p75 = scmp.ne.s32.totalorder %s70, %s72
    %p76 = scmp.eq.s32.totalorder %s10, 0
    %p77 = por %p75, %p76
    %p78 = scmp.ne.s32.totalorder %s70, %s72
    %p79 = scmp.eq.s32.totalorder %s15, 3
    %p80 = por %p78, %p79
    %p81 = scmp.ne.s32.totalorder %s72, %s73
    %p82 = scmp.eq.s32.totalorder %s15, 0
    %p83 = por %p81, %p82
    %p84 = scmp.ne.s32.totalorder %s72, %s73
    %p85 = scmp.eq.s32.totalorder %s16, 3
    %p86 = por %p84, %p85
    %p88 = scmp.ne.s32.totalorder %s73, %s87
    %p89 = scmp.eq.s32.totalorder %s16, 0
    %p90 = por %p88, %p89
    %s92 = sadd.s32 %s91, 1
    %p95 = scmp.eq.s32.totalorder %s10, 3
    %p96 = scmp.ne.s32.totalorder %s91, %s93
    %p97 = scmp.eq.s32.totalorder %s10, 0
    %p98 = por %p96, %p97
    %p99 = scmp.ne.s32.totalorder %s91, %s93
    %p100 = scmp.eq.s32.totalorder %s15, 3
    %p101 = por %p99, %p100
    %p102 = scmp.ne.s32.totalorder %s93, %s94
    %p103 = scmp.eq.s32.totalorder %s15, 0
    %p104 = por %p102, %p103
    %p105 = scmp.ne.s32.totalorder %s93, %s94
    %p106 = scmp.eq.s32.totalorder %s16, 3
    %p107 = por %p105, %p106
    %p109 = scmp.ne.s32.totalorder %s94, %s108
    %p110 = scmp.eq.s32.totalorder %s16, 0
    %p111 = por %p109, %p110
    %s112 = ssub.s32 %s10, %s17
    %p113 = scmp.eq.s32.totalorder %s112, 0
    %s115 = sadd.s32 %s114, 1
    %s116 = scalar_select %p113, %s114, %s115
    %p119 = pneg %p113
    %p120 = scmp.eq.s32.totalorder %s10, 3
    %p121 = por %p119, %p120
    %p122 = scmp.ne.s32.totalorder %s114, %s117
    %p123 = scmp.eq.s32.totalorder %s10, 0
    %p124 = por %p122, %p123
    %p125 = scmp.ne.s32.totalorder %s114, %s117
    %p126 = scmp.eq.s32.totalorder %s15, 3
    %p127 = por %p125, %p126
    %p128 = scmp.ne.s32.totalorder %s117, %s118
    %p129 = scmp.eq.s32.totalorder %s15, 0
    %p130 = por %p128, %p129
    %p131 = scmp.ne.s32.totalorder %s117, %s118
    %p132 = scmp.eq.s32.totalorder %s16, 3
    %p133 = por %p131, %p132
    %p135 = scmp.ne.s32.totalorder %s118, %s134
    %p136 = scmp.eq.s32.totalorder %s16, 0
    %p137 = por %p135, %p136
    %p138 = scmp.le.s32.totalorder 1, %s10
    %p139 = scmp.lt.s32.totalorder %s10, 5
    %p140 = pnand %p138, %p139
    %p141 = pneg %p140
    // Predicated region
    $region9: #{deform_conv2d_forward.1} parent=5 // pred_check
      _
    $region10: #{deform_conv2d_forward.1} parent=5 // pred_check_branch
      %143 = sbr.rel (%p140) target = $region12
    $region11: #{deform_conv2d_forward.1} parent=5 // pred_region
      %s144 = ssub.s32 %s10, 1
      // Predicated region
      $region13: #{deform_conv2d_forward.1} parent=11 // pred_check
        %p145 = pneg %p83
      $region14: #{deform_conv2d_forward.1} parent=11 // pred_check_branch
        %147 = sbr.rel (%p145) target = $region16
      $region15: #{deform_conv2d_forward.1} parent=11 // pred_region
        _
      $region16: #{deform_conv2d_forward.1} parent=11 // pred_fallthru
        _
      // Predicated region
      $region17: #{deform_conv2d_forward.1} parent=11 // pred_check
        %p148 = pneg %p104
      $region18: #{deform_conv2d_forward.1} parent=11 // pred_check_branch
        %150 = sbr.rel (%p148) target = $region20
      $region19: #{deform_conv2d_forward.1} parent=11 // pred_region
        _
      $region20: #{deform_conv2d_forward.1} parent=11 // pred_fallthru
        _
    $region12: #{deform_conv2d_forward.1} parent=5 // pred_fallthru
      _
    %p151 = scmp.lt.s32.totalorder %s10, 4
    // Predicated region
    $region21: #{deform_conv2d_forward.1} parent=5 // pred_check
      %p152 = pneg %p151
    $region22: #{deform_conv2d_forward.1} parent=5 // pred_check_branch
      %154 = sbr.rel (%p152) target = $region24
    $region23: #{deform_conv2d_forward.1} parent=5 // pred_region
      // Predicated region
      $region25: #{deform_conv2d_forward.1} parent=23 // pred_check
        %p155 = pneg %p30
      $region26: #{deform_conv2d_forward.1} parent=23 // pred_check_branch
        %157 = sbr.rel (%p155) target = $region28
      $region27: #{deform_conv2d_forward.1} parent=23 // pred_region
        %s158 = smul.u32 16, %s10
        %p159 = scmp.lt.s32.totalorder %s158, 63
        %s160 = scalar_select %p159, %s158, 63
        %s161 = smul.addr %s160, 4
        %s162 = scalar_lea.vmem %s0, %s161
        %s163 = smul.u32 16, %s10
      $region28: #{deform_conv2d_forward.1} parent=23 // pred_fallthru
        _
      // Predicated region
      $region29: #{deform_conv2d_forward.1} parent=23 // pred_check
        %p164 = pneg %p56
      $region30: #{deform_conv2d_forward.1} parent=23 // pred_check_branch
        %166 = sbr.rel (%p164) target = $region32
      $region31: #{deform_conv2d_forward.1} parent=23 // pred_region
        %s167 = smul.u32 16, %s10
        %p168 = scmp.lt.s32.totalorder %s167, 63
        %s169 = scalar_select %p168, %s167, 63
        %s170 = smul.addr %s169, 2
        %s171 = smul.addr %s170, 4
        %s172 = scalar_lea.vmem %s1, %s171
        %s173 = smul.u32 16, %s10
      $region32: #{deform_conv2d_forward.1} parent=23 // pred_fallthru
        _
    $region24: #{deform_conv2d_forward.1} parent=5 // pred_fallthru
      _
    %p174 = scmp.le.s32.totalorder 1, %s10
    %p175 = scmp.lt.s32.totalorder %s10, 5
    %p176 = pnand %p174, %p175
    %p177 = pneg %p176
    // Predicated region
    $region33: #{deform_conv2d_forward.1} parent=5 // pred_check
      _
    $region34: #{deform_conv2d_forward.1} parent=5 // pred_check_branch
      %179 = sbr.rel (%p176) target = $region36
    $region35: #{deform_conv2d_forward.1} parent=5 // pred_region
      %s180 = ssub.s32 %s10, 1
      %s181 = smul.u32 16, %s15
      %p182 = scmp.lt.s32.totalorder %s181, 63
      %s183 = scalar_select %p182, %s181, 63
      %s184 = smul.addr %s183, 4
      %s185 = scalar_lea.vmem %s0, %s184
      %p186 = pneg %p36
      %p187 = pneg %p33
      %s188 = smul.u32 16, %s15
      %p189 = scmp.lt.s32.totalorder %s188, 63
      %s190 = scalar_select %p189, %s188, 63
      %s191 = smul.addr %s190, 2
      %s192 = smul.addr %s191, 4
      %s193 = scalar_lea.vmem %s1, %s192
      %p194 = pneg %p62
      %p195 = pneg %p59
      %p196 = pneg %p83
      %p197 = pneg %p80
      %p198 = pneg %p104
      %p199 = pneg %p101
      %p200 = pneg %p130
      %p201 = pneg %p127
      %s202 = smul.u32 16, %s15
      %p203 = scmp.lt.s32.totalorder %s202, 63
      %s204 = scalar_select %p203, %s202, 63
      %s205 = smul.addr %s204, 4
      %s206 = scalar_lea.vmem %s4, %s205
      %s207 = smul.u32 16, %s15
      %p208 = scmp.lt.s32.totalorder %s207, 63
      %s209 = scalar_select %p208, %s207, 63
      %s210 = smul.addr %s209, 4
      %s211 = scalar_lea.vmem %s0, %s210
      %s212 = smul.u32 16, %s15
      %s213 = smul.u32 16, %s15
      %p214 = scmp.lt.s32.totalorder %s213, 63
      %s215 = scalar_select %p214, %s213, 63
      %s216 = smul.addr %s215, 2
      %s217 = smul.addr %s216, 4
      %s218 = scalar_lea.vmem %s1, %s217
      %s219 = smul.u32 16, %s15
      %s220 = smul.u32 16, %s15
      %p221 = scmp.lt.s32.totalorder %s220, 63
      %s222 = scalar_select %p221, %s220, 63
      %s223 = smul.addr %s222, 4
      %s224 = scalar_lea.vmem %s4, %s223
      %s225 = smul.u32 16, %s15
      %v227 = vld [vmem:[%s211] sm:$0xf]
      %v228 = vld [vmem:[%s211 + $0x4] sm:$0xf]
      %v229 = vld [vmem:[%s211 + $0x8] sm:$0xf]
      %v230 = vld [vmem:[%s211 + $0xc] sm:$0xf]
      %v231 = vld [vmem:[%s211 + $0x10] sm:$0xf]
      %v232 = vld [vmem:[%s211 + $0x14] sm:$0xf]
      %v233 = vld [vmem:[%s211 + $0x18] sm:$0xf]
      %v234 = vld [vmem:[%s211 + $0x1c] sm:$0xf]
      %v235 = vld [vmem:[%s211 + $0x20] sm:$0xf]
      %v236 = vld [vmem:[%s211 + $0x24] sm:$0xf]
      %v237 = vld [vmem:[%s211 + $0x28] sm:$0xf]
      %v238 = vld [vmem:[%s211 + $0x2c] sm:$0xf]
      %v239 = vld [vmem:[%s211 + $0x30] sm:$0xf]
      %v240 = vld [vmem:[%s211 + $0x34] sm:$0xf]
      %v241 = vld [vmem:[%s211 + $0x38] sm:$0xf]
      %v242 = vld [vmem:[%s211 + $0x3c] sm:$0xf]
      %v243 = vld [vmem:[%s2] sm:$0xff]
      %v244 = vld [vmem:[%s2 + $0x8] sm:$0xff]
      %v245 = vld [vmem:[%s2 + $0x10] sm:$0xff]
      %v246 = vld [vmem:[%s2 + $0x18] sm:$0xff]
      %v247 = vld [vmem:[%s2 + $0x20] sm:$0x33]
      %v264 = vunpack.c.l.b16 %v227
      %v265 = vunpack.c.l.b16 %v228
      %v266 = vunpack.c.l.b16 %v229
      %v267 = vunpack.c.l.b16 %v230
      %v268 = vunpack.c.l.b16 %v231
      %v269 = vunpack.c.l.b16 %v232
      %v270 = vunpack.c.l.b16 %v233
      %v271 = vunpack.c.l.b16 %v234
      %v272 = vunpack.c.l.b16 %v235
      %v273 = vunpack.c.l.b16 %v236
      %v274 = vunpack.c.l.b16 %v237
      %v275 = vunpack.c.l.b16 %v238
      %v276 = vunpack.c.l.b16 %v239
      %v277 = vunpack.c.l.b16 %v240
      %v278 = vunpack.c.l.b16 %v241
      %v279 = vunpack.c.l.b16 %v242
      %v280 = vpack.c.b16 %v265, %v264
      %v281 = vpack.c.b16 %v267, %v266
      %v282 = vpack.c.b16 %v269, %v268
      %v283 = vpack.c.b16 %v271, %v270
      %v284 = vpack.c.b16 %v273, %v272
      %v285 = vpack.c.b16 %v275, %v274
      %v286 = vpack.c.b16 %v277, %v276
      %v287 = vpack.c.b16 %v279, %v278
      %v293 = vunpack.c.l.b16 %v243
      %v294 = vunpack.c.h.b16 %v243
      %v295 = vunpack.c.l.b16 %v244
      %v296 = vunpack.c.h.b16 %v244
      %v297 = vunpack.c.l.b16 %v245
      %v298 = vunpack.c.h.b16 %v245
      %v299 = vunpack.c.l.b16 %v246
      %v300 = vunpack.c.h.b16 %v246
      %v301 = vunpack.c.l.b16 %v247
      %v302 = vunpack.c.h.b16 %v247
      %v303 = vpack.c.b16 %v295, %v293
      %v304 = vpack.c.b16 %v296, %v294
      %v305 = vpack.c.b16 %v299, %v297
      %v306 = vpack.c.b16 %v300, %v298
      %v307 = vpack.c.b16 %v301, %v301
      %v308 = vpack.c.b16 %v302, %v302
      %vm313 = vcmask 293888
      %v315 = vsel %vm313, %v280, 0
      %v318 = vsel %vm313, %v281, 0
      %v321 = vsel %vm313, %v282, 0
      %v324 = vsel %vm313, %v283, 0
      %v327 = vsel %vm313, %v284, 0
      %v330 = vsel %vm313, %v285, 0
      %v333 = vsel %vm313, %v286, 0
      %v336 = vsel %vm313, %v287, 0
      %vm338 = vcmask 1041408
      %v340 = vsel %vm338, %v307, 0
      %v343 = vsel %vm338, %v308, 0
      %345 = vmatprep.subr.bf16.mxu0 %v304
      %346 = vmatpush1.bf16.msra.mxu0 %v303
      %347 = vmatprep.subr.bf16.mxu0 %v306
      %348 = vmatpush1.bf16.msra.mxu0 %v305
      %349 = vmatprep.subr.bf16.mxu0 %v343
      %350 = vmatpush1.bf16.msra.mxu0 %v340
      %351 = vmatprep.subr.bf16.mxu0 0
      %352 = vmatpush1.bf16.msra.mxu0 0
      %353 = vmatprep.subr.bf16.mxu0 0
      %354 = vmatpush1.bf16.msra.mxu0 0
      %355 = vmatprep.subr.bf16.mxu0 0
      %356 = vmatpush1.bf16.msra.mxu0 0
      %357 = vmatprep.subr.bf16.mxu0 0
      %358 = vmatpush1.bf16.msra.mxu0 0
      %359 = vmatprep.subr.bf16.mxu0 0
      %360 = vmatpush1.bf16.msra.mxu0 0
      %361 = vmatprep.subr.bf16.mxu0 0
      %362 = vmatpush1.bf16.msra.mxu0 0
      %363 = vmatprep.subr.bf16.mxu0 0
      %364 = vmatpush1.bf16.msra.mxu0 0
      %365 = vmatprep.subr.bf16.mxu0 0
      %366 = vmatpush1.bf16.msra.mxu0 0
      %367 = vmatprep.subr.bf16.mxu0 0
      %368 = vmatpush1.bf16.msra.mxu0 0
      %369 = vmatprep.subr.bf16.mxu0 0
      %370 = vmatpush1.bf16.msra.mxu0 0
      %371 = vmatprep.subr.bf16.mxu0 0
      %372 = vmatpush1.bf16.msra.mxu0 0
      %373 = vmatprep.subr.bf16.mxu0 0
      %374 = vmatpush1.bf16.msra.mxu0 0
      %375 = vmatprep.subr.bf16.mxu0 0
      %376 = vmatpush1.bf16.msra.mxu0 0
      %377 = vmatprep.mubr.bf16.mxu0 0
      %378 = vmatmul.mubr.bf16.gmra.mrb[0].mxu0 %v315
      %v379 = vpop.f32.mrb[0].mxu0
      %v380 = vadd.f32 0.0, %v379
      %v381 = vpop.f32.mrb[0].mxu0
      %v382 = vadd.f32 0.0, %v381
      %v383 = vpop.f32.mrb[0].mxu0
      %v384 = vadd.f32 0.0, %v383
      %v385 = vpop.f32.mrb[0].mxu0
      %v386 = vadd.f32 0.0, %v385
      %387 = vmatprep.mubr.bf16.mxu0 0
      %388 = vmatmul.mubr.bf16.gmra.mrb[0].mxu0 %v318
      %v389 = vpop.f32.mrb[0].mxu0
      %v390 = vadd.f32 0.0, %v389
      %v391 = vpop.f32.mrb[0].mxu0
      %v392 = vadd.f32 0.0, %v391
      %v393 = vpop.f32.mrb[0].mxu0
      %v394 = vadd.f32 0.0, %v393
      %v395 = vpop.f32.mrb[0].mxu0
      %v396 = vadd.f32 0.0, %v395
      %397 = vmatprep.mubr.bf16.mxu0 0
      %398 = vmatmul.mubr.bf16.gmra.mrb[0].mxu0 %v321
      %v399 = vpop.f32.mrb[0].mxu0
      %v400 = vadd.f32 0.0, %v399
      %v401 = vpop.f32.mrb[0].mxu0
      %v402 = vadd.f32 0.0, %v401
      %v403 = vpop.f32.mrb[0].mxu0
      %v404 = vadd.f32 0.0, %v403
      %v405 = vpop.f32.mrb[0].mxu0
      %v406 = vadd.f32 0.0, %v405
      %407 = vmatprep.mubr.bf16.mxu0 0
      %408 = vmatmul.mubr.bf16.gmra.mrb[0].mxu0 %v324
      %v409 = vpop.f32.mrb[0].mxu0
      %v410 = vadd.f32 0.0, %v409
      %v411 = vpop.f32.mrb[0].mxu0
      %v412 = vadd.f32 0.0, %v411
      %v413 = vpop.f32.mrb[0].mxu0
      %v414 = vadd.f32 0.0, %v413
      %v415 = vpop.f32.mrb[0].mxu0
      %v416 = vadd.f32 0.0, %v415
      %417 = vmatprep.mubr.bf16.mxu0 0
      %418 = vmatmul.mubr.bf16.gmra.mrb[0].mxu0 %v327
      %v419 = vpop.f32.mrb[0].mxu0
      %v420 = vadd.f32 0.0, %v419
      %v421 = vpop.f32.mrb[0].mxu0
      %v422 = vadd.f32 0.0, %v421
      %v423 = vpop.f32.mrb[0].mxu0
      %v424 = vadd.f32 0.0, %v423
      %v425 = vpop.f32.mrb[0].mxu0
      %v426 = vadd.f32 0.0, %v425
      %427 = vmatprep.mubr.bf16.mxu0 0
      %428 = vmatmul.mubr.bf16.gmra.mrb[0].mxu0 %v330
      %v429 = vpop.f32.mrb[0].mxu0
      %v430 = vadd.f32 0.0, %v429
      %v431 = vpop.f32.mrb[0].mxu0
      %v432 = vadd.f32 0.0, %v431
      %v433 = vpop.f32.mrb[0].mxu0
      %v434 = vadd.f32 0.0, %v433
      %v435 = vpop.f32.mrb[0].mxu0
      %v436 = vadd.f32 0.0, %v435
      %437 = vmatprep.mubr.bf16.mxu0 0
      %438 = vmatmul.mubr.bf16.gmra.mrb[0].mxu0 %v333
      %v439 = vpop.f32.mrb[0].mxu0
      %v440 = vadd.f32 0.0, %v439
      %v441 = vpop.f32.mrb[0].mxu0
      %v442 = vadd.f32 0.0, %v441
      %v443 = vpop.f32.mrb[0].mxu0
      %v444 = vadd.f32 0.0, %v443
      %v445 = vpop.f32.mrb[0].mxu0
      %v446 = vadd.f32 0.0, %v445
      %447 = vmatprep.mubr.bf16.mxu0 0
      %448 = vmatmul.mubr.bf16.gmra.mrb[0].mxu0 %v336
      %v449 = vpop.f32.mrb[0].mxu0
      %v450 = vadd.f32 0.0, %v449
      %v451 = vpop.f32.mrb[0].mxu0
      %v452 = vadd.f32 0.0, %v451
      %v453 = vpop.f32.mrb[0].mxu0
      %v454 = vadd.f32 0.0, %v453
      %v455 = vpop.f32.mrb[0].mxu0
      %v456 = vadd.f32 0.0, %v455
      %457 = vdwg.mxu0
      %v458 = vld [vmem:[%s218] sm:$0xff]
      %v459 = vld [vmem:[%s218 + $0x8] sm:$0xff]
      %v460 = vld [vmem:[%s218 + $0x10] sm:$0xff]
      %v461 = vld [vmem:[%s218 + $0x18] sm:$0xff]
      %v462 = vld [vmem:[%s218 + $0x20] sm:$0xff]
      %v463 = vld [vmem:[%s218 + $0x28] sm:$0xff]
      %v464 = vld [vmem:[%s218 + $0x30] sm:$0xff]
      %v465 = vld [vmem:[%s218 + $0x38] sm:$0xff]
      %v466 = vld [vmem:[%s218 + $0x40] sm:$0xff]
      %v467 = vld [vmem:[%s218 + $0x48] sm:$0xff]
      %v468 = vld [vmem:[%s218 + $0x50] sm:$0xff]
      %v469 = vld [vmem:[%s218 + $0x58] sm:$0xff]
      %v470 = vld [vmem:[%s218 + $0x60] sm:$0xff]
      %v471 = vld [vmem:[%s218 + $0x68] sm:$0xff]
      %v472 = vld [vmem:[%s218 + $0x70] sm:$0xff]
      %v473 = vld [vmem:[%s218 + $0x78] sm:$0xff]
      %v474 = vunpack.c.l.bf16 %v458
      %v475 = vunpack.c.h.bf16 %v458
      %v476 = vunpack.c.l.bf16 %v459
      %v477 = vunpack.c.h.bf16 %v459
      %v478 = vunpack.c.l.bf16 %v460
      %v479 = vunpack.c.h.bf16 %v460
      %v480 = vunpack.c.l.bf16 %v461
      %v481 = vunpack.c.h.bf16 %v461
      %v482 = vunpack.c.l.bf16 %v462
      %v483 = vunpack.c.h.bf16 %v462
      %v484 = vunpack.c.l.bf16 %v463
      %v485 = vunpack.c.h.bf16 %v463
      %v486 = vunpack.c.l.bf16 %v464
      %v487 = vunpack.c.h.bf16 %v464
      %v488 = vunpack.c.l.bf16 %v465
      %v489 = vunpack.c.h.bf16 %v465
      %v490 = vunpack.c.l.bf16 %v466
      %v491 = vunpack.c.h.bf16 %v466
      %v492 = vunpack.c.l.bf16 %v467
      %v493 = vunpack.c.h.bf16 %v467
      %v494 = vunpack.c.l.bf16 %v468
      %v495 = vunpack.c.h.bf16 %v468
      %v496 = vunpack.c.l.bf16 %v469
      %v497 = vunpack.c.h.bf16 %v469
      %v498 = vunpack.c.l.bf16 %v470
      %v499 = vunpack.c.h.bf16 %v470
      %v500 = vunpack.c.l.bf16 %v471
      %v501 = vunpack.c.h.bf16 %v471
      %v502 = vunpack.c.l.bf16 %v472
      %v503 = vunpack.c.h.bf16 %v472
      %v504 = vunpack.c.l.bf16 %v473
      %v505 = vunpack.c.h.bf16 %v473
      %v506 = vmul.f32 %v380, %v474
      %v507 = vmul.f32 %v382, %v475
      %v508 = vmul.f32 %v384, %v476
      %v509 = vmul.f32 %v386, %v477
      %v510 = vmul.f32 %v390, %v478
      %v511 = vmul.f32 %v392, %v479
      %v512 = vmul.f32 %v394, %v480
      %v513 = vmul.f32 %v396, %v481
      %v514 = vmul.f32 %v400, %v482
      %v515 = vmul.f32 %v402, %v483
      %v516 = vmul.f32 %v404, %v484
      %v517 = vmul.f32 %v406, %v485
      %v518 = vmul.f32 %v410, %v486
      %v519 = vmul.f32 %v412, %v487
      %v520 = vmul.f32 %v414, %v488
      %v521 = vmul.f32 %v416, %v489
      %v522 = vmul.f32 %v420, %v490
      %v523 = vmul.f32 %v422, %v491
      %v524 = vmul.f32 %v424, %v492
      %v525 = vmul.f32 %v426, %v493
      %v526 = vmul.f32 %v430, %v494
      %v527 = vmul.f32 %v432, %v495
      %v528 = vmul.f32 %v434, %v496
      %v529 = vmul.f32 %v436, %v497
      %v530 = vmul.f32 %v440, %v498
      %v531 = vmul.f32 %v442, %v499
      %v532 = vmul.f32 %v444, %v500
      %v533 = vmul.f32 %v446, %v501
      %v534 = vmul.f32 %v450, %v502
      %v535 = vmul.f32 %v452, %v503
      %v536 = vmul.f32 %v454, %v504
      %v537 = vmul.f32 %v456, %v505
      %v538 = vpack.c.bf16 %v508, %v506
      %v539 = vpack.c.bf16 %v509, %v507
      %v540 = vpack.c.bf16 %v512, %v510
      %v541 = vpack.c.bf16 %v513, %v511
      %v542 = vpack.c.bf16 %v516, %v514
      %v543 = vpack.c.bf16 %v517, %v515
      %v544 = vpack.c.bf16 %v520, %v518
      %v545 = vpack.c.bf16 %v521, %v519
      %v546 = vpack.c.bf16 %v524, %v522
      %v547 = vpack.c.bf16 %v525, %v523
      %v548 = vpack.c.bf16 %v528, %v526
      %v549 = vpack.c.bf16 %v529, %v527
      %v550 = vpack.c.bf16 %v532, %v530
      %v551 = vpack.c.bf16 %v533, %v531
      %v552 = vpack.c.bf16 %v536, %v534
      %v553 = vpack.c.bf16 %v537, %v535
      %v554 = vld [vmem:[%s3] sm:$0xf]
      %v555 = vld [vmem:[%s3 + $0x4] sm:$0xf]
      %v556 = vld [vmem:[%s3 + $0x8] sm:$0xf]
      %v557 = vld [vmem:[%s3 + $0xc] sm:$0xf]
      %v558 = vld [vmem:[%s3 + $0x10] sm:$0xf]
      %v559 = vld [vmem:[%s3 + $0x14] sm:$0xf]
      %v560 = vld [vmem:[%s3 + $0x18] sm:$0xf]
      %v561 = vld [vmem:[%s3 + $0x1c] sm:$0xf]
      %v562 = vld [vmem:[%s3 + $0x20] sm:$0xf]
      %v563 = vld [vmem:[%s3 + $0x24] sm:$0xf]
      %v564 = vld [vmem:[%s3 + $0x28] sm:$0xf]
      %v565 = vld [vmem:[%s3 + $0x2c] sm:$0xf]
      %v566 = vld [vmem:[%s3 + $0x30] sm:$0xf]
      %v567 = vld [vmem:[%s3 + $0x34] sm:$0xf]
      %v568 = vld [vmem:[%s3 + $0x38] sm:$0xf]
      %v569 = vld [vmem:[%s3 + $0x3c] sm:$0xf]
      %v570 = vld [vmem:[%s3 + $0x40] sm:$0xf]
      %v571 = vld [vmem:[%s3 + $0x44] sm:$0xf]
      %v590 = vunpack.c.l.b16 %v554
      %v591 = vunpack.c.l.b16 %v555
      %v592 = vunpack.c.l.b16 %v556
      %v593 = vunpack.c.l.b16 %v557
      %v594 = vunpack.c.l.b16 %v558
      %v595 = vunpack.c.l.b16 %v559
      %v596 = vunpack.c.l.b16 %v560
      %v597 = vunpack.c.l.b16 %v561
      %v598 = vunpack.c.l.b16 %v562
      %v599 = vunpack.c.l.b16 %v563
      %v600 = vunpack.c.l.b16 %v564
      %v601 = vunpack.c.l.b16 %v565
      %v602 = vunpack.c.l.b16 %v566
      %v603 = vunpack.c.l.b16 %v567
      %v604 = vunpack.c.l.b16 %v568
      %v605 = vunpack.c.l.b16 %v569
      %v606 = vunpack.c.l.b16 %v570
      %v607 = vunpack.c.l.b16 %v571
      %v608 = vpack.c.b16 %v591, %v590
      %v609 = vpack.c.b16 %v593, %v592
      %v610 = vpack.c.b16 %v595, %v594
      %v611 = vpack.c.b16 %v597, %v596
      %v612 = vpack.c.b16 %v599, %v598
      %v613 = vpack.c.b16 %v601, %v600
      %v614 = vpack.c.b16 %v603, %v602
      %v615 = vpack.c.b16 %v605, %v604
      %v616 = vpack.c.b16 %v607, %v606
      %vm626 = vcmask 130048
      %v628 = vsel %vm626, %v539, 0
      %v631 = vsel %vm626, %v541, 0
      %v634 = vsel %vm626, %v543, 0
      %v637 = vsel %vm626, %v545, 0
      %v640 = vsel %vm626, %v547, 0
      %v643 = vsel %vm626, %v549, 0
      %v646 = vsel %vm626, %v551, 0
      %v649 = vsel %vm626, %v553, 0
      %651 = vmatprep.subr.bf16.mxu0 0
      %652 = vmatpush1.bf16.msra.mxu0 %v608
      %653 = vmatprep.subr.bf16.mxu0 0
      %654 = vmatpush1.bf16.msra.mxu0 %v609
      %655 = vmatprep.subr.bf16.mxu0 0
      %656 = vmatpush1.bf16.msra.mxu0 %v610
      %657 = vmatprep.subr.bf16.mxu0 0
      %658 = vmatpush1.bf16.msra.mxu0 %v611
      %659 = vmatprep.subr.bf16.mxu0 0
      %660 = vmatpush1.bf16.msra.mxu0 %v612
      %661 = vmatprep.subr.bf16.mxu0 0
      %662 = vmatpush1.bf16.msra.mxu0 %v613
      %663 = vmatprep.subr.bf16.mxu0 0
      %664 = vmatpush1.bf16.msra.mxu0 %v614
      %665 = vmatprep.subr.bf16.mxu0 0
      %666 = vmatpush1.bf16.msra.mxu0 %v615
      %667 = vmatprep.subr.bf16.mxu0 0
      %668 = vmatpush1.bf16.msra.mxu0 %v616
      %669 = vmatprep.subr.bf16.mxu0 0
      %670 = vmatpush1.bf16.msra.mxu0 0
      %671 = vmatprep.subr.bf16.mxu0 0
      %672 = vmatpush1.bf16.msra.mxu0 0
      %673 = vmatprep.subr.bf16.mxu0 0
      %674 = vmatpush1.bf16.msra.mxu0 0
      %675 = vmatprep.subr.bf16.mxu0 0
      %676 = vmatpush1.bf16.msra.mxu0 0
      %677 = vmatprep.subr.bf16.mxu0 0
      %678 = vmatpush1.bf16.msra.mxu0 0
      %679 = vmatprep.subr.bf16.mxu0 0
      %680 = vmatpush1.bf16.msra.mxu0 0
      %681 = vmatprep.subr.bf16.mxu0 0
      %682 = vmatpush1.bf16.msra.mxu0 0
      %683 = vmatprep.mubr.bf16.mxu0 %v628
      %684 = vmatmul.mubr.bf16.gmra.mrb[0].mxu0 %v538
      %v685 = vpop.f32.mrb[0].mxu0
      %v686 = vadd.f32 0.0, %v685
      %v687 = vpop.f32.mrb[0].mxu0
      %v688 = vpop.f32.mrb[0].mxu0
      %v689 = vadd.f32 0.0, %v688
      %v690 = vpop.f32.mrb[0].mxu0
      %691 = vmatprep.mubr.bf16.mxu0 %v631
      %692 = vmatmul.mubr.bf16.gmra.mrb[0].mxu0 %v540
      %v693 = vpop.f32.mrb[0].mxu0
      %v694 = vadd.f32 0.0, %v693
      %v695 = vpop.f32.mrb[0].mxu0
      %v696 = vpop.f32.mrb[0].mxu0
      %v697 = vadd.f32 0.0, %v696
      %v698 = vpop.f32.mrb[0].mxu0
      %699 = vmatprep.mubr.bf16.mxu0 %v634
      %700 = vmatmul.mubr.bf16.gmra.mrb[0].mxu0 %v542
      %v701 = vpop.f32.mrb[0].mxu0
      %v702 = vadd.f32 0.0, %v701
      %v703 = vpop.f32.mrb[0].mxu0
      %v704 = vpop.f32.mrb[0].mxu0
      %v705 = vadd.f32 0.0, %v704
      %v706 = vpop.f32.mrb[0].mxu0
      %707 = vmatprep.mubr.bf16.mxu0 %v637
      %708 = vmatmul.mubr.bf16.gmra.mrb[0].mxu0 %v544
      %v709 = vpop.f32.mrb[0].mxu0
      %v710 = vadd.f32 0.0, %v709
      %v711 = vpop.f32.mrb[0].mxu0
      %v712 = vpop.f32.mrb[0].mxu0
      %v713 = vadd.f32 0.0, %v712
      %v714 = vpop.f32.mrb[0].mxu0
      %715 = vmatprep.mubr.bf16.mxu0 %v640
      %716 = vmatmul.mubr.bf16.gmra.mrb[0].mxu0 %v546
      %v717 = vpop.f32.mrb[0].mxu0
      %v718 = vadd.f32 0.0, %v717
      %v719 = vpop.f32.mrb[0].mxu0
      %v720 = vpop.f32.mrb[0].mxu0
      %v721 = vadd.f32 0.0, %v720
      %v722 = vpop.f32.mrb[0].mxu0
      %723 = vmatprep.mubr.bf16.mxu0 %v643
      %724 = vmatmul.mubr.bf16.gmra.mrb[0].mxu0 %v548
      %v725 = vpop.f32.mrb[0].mxu0
      %v726 = vadd.f32 0.0, %v725
      %v727 = vpop.f32.mrb[0].mxu0
      %v728 = vpop.f32.mrb[0].mxu0
      %v729 = vadd.f32 0.0, %v728
      %v730 = vpop.f32.mrb[0].mxu0
      %731 = vmatprep.mubr.bf16.mxu0 %v646
      %732 = vmatmul.mubr.bf16.gmra.mrb[0].mxu0 %v550
      %v733 = vpop.f32.mrb[0].mxu0
      %v734 = vadd.f32 0.0, %v733
      %v735 = vpop.f32.mrb[0].mxu0
      %v736 = vpop.f32.mrb[0].mxu0
      %v737 = vadd.f32 0.0, %v736
      %v738 = vpop.f32.mrb[0].mxu0
      %739 = vmatprep.mubr.bf16.mxu0 %v649
      %740 = vmatmul.mubr.bf16.gmra.mrb[0].mxu0 %v552
      %v741 = vpop.f32.mrb[0].mxu0
      %v742 = vadd.f32 0.0, %v741
      %v743 = vpop.f32.mrb[0].mxu0
      %v744 = vpop.f32.mrb[0].mxu0
      %v745 = vadd.f32 0.0, %v744
      %v746 = vpop.f32.mrb[0].mxu0
      %747 = vdwg.mxu0
      %v748 = vpack.c.bf16 %v689, %v686
      %v749 = vpack.c.bf16 %v697, %v694
      %v750 = vpack.c.bf16 %v705, %v702
      %v751 = vpack.c.bf16 %v713, %v710
      %v752 = vpack.c.bf16 %v721, %v718
      %v753 = vpack.c.bf16 %v729, %v726
      %v754 = vpack.c.bf16 %v737, %v734
      %v755 = vpack.c.bf16 %v745, %v742
      %v764 = vunpack.c.l.b16 %v748
      %v765 = vunpack.c.h.b16 %v748
      %v766 = vunpack.c.l.b16 %v749
      %v767 = vunpack.c.h.b16 %v749
      %v768 = vunpack.c.l.b16 %v750
      %v769 = vunpack.c.h.b16 %v750
      %v770 = vunpack.c.l.b16 %v751
      %v771 = vunpack.c.h.b16 %v751
      %v772 = vunpack.c.l.b16 %v752
      %v773 = vunpack.c.h.b16 %v752
      %v774 = vunpack.c.l.b16 %v753
      %v775 = vunpack.c.h.b16 %v753
      %v776 = vunpack.c.l.b16 %v754
      %v777 = vunpack.c.h.b16 %v754
      %v778 = vunpack.c.l.b16 %v755
      %v779 = vunpack.c.h.b16 %v755
      %v780 = vpack.c.b16 %v764, %v764
      %v781 = vpack.c.b16 %v765, %v765
      %v782 = vpack.c.b16 %v766, %v766
      %v783 = vpack.c.b16 %v767, %v767
      %v784 = vpack.c.b16 %v768, %v768
      %v785 = vpack.c.b16 %v769, %v769
      %v786 = vpack.c.b16 %v770, %v770
      %v787 = vpack.c.b16 %v771, %v771
      %v788 = vpack.c.b16 %v772, %v772
      %v789 = vpack.c.b16 %v773, %v773
      %v790 = vpack.c.b16 %v774, %v774
      %v791 = vpack.c.b16 %v775, %v775
      %v792 = vpack.c.b16 %v776, %v776
      %v793 = vpack.c.b16 %v777, %v777
      %v794 = vpack.c.b16 %v778, %v778
      %v795 = vpack.c.b16 %v779, %v779
      %812 = vst [vmem:[%s224] sm:$0xf] %v780
      %813 = vst [vmem:[%s224 + $0x4] sm:$0xf] %v781
      %814 = vst [vmem:[%s224 + $0x8] sm:$0xf] %v782
      %815 = vst [vmem:[%s224 + $0xc] sm:$0xf] %v783
      %816 = vst [vmem:[%s224 + $0x10] sm:$0xf] %v784
      %817 = vst [vmem:[%s224 + $0x14] sm:$0xf] %v785
      %818 = vst [vmem:[%s224 + $0x18] sm:$0xf] %v786
      %819 = vst [vmem:[%s224 + $0x1c] sm:$0xf] %v787
      %820 = vst [vmem:[%s224 + $0x20] sm:$0xf] %v788
      %821 = vst [vmem:[%s224 + $0x24] sm:$0xf] %v789
      %822 = vst [vmem:[%s224 + $0x28] sm:$0xf] %v790
      %823 = vst [vmem:[%s224 + $0x2c] sm:$0xf] %v791
      %824 = vst [vmem:[%s224 + $0x30] sm:$0xf] %v792
      %825 = vst [vmem:[%s224 + $0x34] sm:$0xf] %v793
      %826 = vst [vmem:[%s224 + $0x38] sm:$0xf] %v794
      %827 = vst [vmem:[%s224 + $0x3c] sm:$0xf] %v795
      %s828 = smul.u32 16, %s15
      %p829 = scmp.lt.s32.totalorder %s828, 63
      %s830 = scalar_select %p829, %s828, 63
      %s831 = smul.addr %s830, 4
      %s832 = scalar_lea.vmem %s4, %s831
      // Predicated region
      $region37: #{deform_conv2d_forward.1} parent=35 // pred_check
        %p833 = pneg %p127
      $region38: #{deform_conv2d_forward.1} parent=35 // pred_check_branch
        %835 = sbr.rel (%p833) target = $region40
      $region39: #{deform_conv2d_forward.1} parent=35 // pred_region
        %s836 = smul.u32 16, %s15
      $region40: #{deform_conv2d_forward.1} parent=35 // pred_fallthru
        _
    $region36: #{deform_conv2d_forward.1} parent=5 // pred_fallthru
      _
    %p837 = scmp.le.s32.totalorder 2, %s10
    // Predicated region
    $region41: #{deform_conv2d_forward.1} parent=5 // pred_check
      %p838 = pneg %p837
    $region42: #{deform_conv2d_forward.1} parent=5 // pred_check_branch
      %840 = sbr.rel (%p838) target = $region44
    $region43: #{deform_conv2d_forward.1} parent=5 // pred_region
      %s841 = ssub.s32 %s10, 2
      // Predicated region
      $region45: #{deform_conv2d_forward.1} parent=43 // pred_check
        %p842 = pneg %p133
      $region46: #{deform_conv2d_forward.1} parent=43 // pred_check_branch
        %844 = sbr.rel (%p842) target = $region48
      $region47: #{deform_conv2d_forward.1} parent=43 // pred_region
        %s845 = smul.u32 16, %s16
        %p846 = scmp.lt.s32.totalorder %s845, 63
        %s847 = scalar_select %p846, %s845, 63
        %s848 = smul.addr %s847, 4
        %s849 = scalar_lea.vmem %s4, %s848
      $region48: #{deform_conv2d_forward.1} parent=43 // pred_fallthru
        _
    $region44: #{deform_conv2d_forward.1} parent=5 // pred_fallthru
      _
  $region6: #{deform_conv2d_forward.1} parent=0 // loop_footer
    %s14 = sadd.s32 1, %s10
  $region7: #{deform_conv2d_forward.1} parent=0 // loop_footer_branch
    %9 = sbr.rel target = $region3
  $region8: #{deform_conv2d_forward.1} parent=0 // loop_exit
    _

</llo_original>
